<compile_context>
chip_gen: v6e
topology: v6e:2x2x1
jax: 0.10.0
libtpu: 0.0.40
codegen_flags: <defaults>
</compile_context>

<pallas_src>
import jax
import jax.numpy as jnp
from jax.experimental import pallas as pl
from jax.experimental.pallas import tpu as pltpu

# ----------------------------- small synthetic config ------------------------
B = 2                        # batch
C = 3                        # RGB channels
IMG = 16                     # image_size
P = 8                        # patch_size
GH = GW = IMG // P           # patch grid
NP = GH * GW                 # patches per image (4)
D = 32                       # width (hidden size)
HEAD_W = 16                  # head_width
HEADS = D // HEAD_W          # 2 heads
HD = D // HEADS              # head dim (16)
MLP_H = int(D * 4.0)         # mlp_ratio = 4.0 -> 128
DEPTH = 2                    # layers
N = NP + 1                   # tokens incl. cls (5)
N_PAD = ((N + 7) // 8) * 8   # sublane-aligned tokens per image (8)
BNP = B * N_PAD              # folded row count (16)
PATCH_DIM = C * P * P        # 192
EPS_LN = 1e-6
ATT_SCALE = HD ** -0.5
VEC_COLS = max(MLP_H, 3 * D, D)                   # 128 (lane-dense packed vectors)
_R_G1, _R_BE1, _R_BQKV, _R_BP, _R_G2, _R_BE2, _R_B1, _R_B2 = range(8)


# ----------------------------- in-kernel helpers ------------------------------
def _layernorm(x, g, b):
    """LayerNorm(eps=1e-6): f32 statistics on the VPU, rsqrt on the EUP."""
    mu = jnp.mean(x, axis=-1, keepdims=True)
    xc = x - mu
    var = jnp.mean(xc * xc, axis=-1, keepdims=True)
    return xc * jax.lax.rsqrt(var + EPS_LN) * g + b


def _mxu(a, w):
    """bf16-in / f32-accumulate matmul (weights are already bf16)."""
    return jnp.dot(a.astype(jnp.bfloat16), w, preferred_element_type=jnp.float32)


# ----------------------------- patch-embed kernel (one shot) ------------------
def patch_embed_kernel(patches_ref, pw_ref, ev_ref, o_ref):
    ev = ev_ref[...]                                   # (N+2, D): [patch_b, cls, pos]
    pb = ev[0:1, :]
    cls = ev[1:2, :]
    pos = ev[2:, :]                                    # (N, D)
    emb = _mxu(patches_ref[...], pw_ref[...]) + pb     # (B*NP, D)
    emb = emb.reshape(B, NP, D) + pos[1:, :]           # + patch positional embed
    cls_row = (cls + pos[0:1, :]).reshape(1, 1, D)
    o_ref[:, 0:1, :] = jnp.broadcast_to(cls_row, (B, 1, D))
    o_ref[:, 1:N, :] = emb
    o_ref[:, N:N_PAD, :] = jnp.zeros((B, N_PAD - N, D), jnp.float32)  # padded rows


# ----------------------------- fused transformer tower ------------------------
def tower_kernel(tokens_ref, wqkv_ref, wp_ref, w1_ref, w2_ref, vec_ref, o_ref):
    l = pl.program_id(0)

    @pl.when(l == 0)
    def _init():
        o_ref[...] = tokens_ref[...]                   # activations become resident

    # packed per-layer vectors: one (8, VEC_COLS) vreg-sized slab, row per vector
    vec = vec_ref[0]
    g1 = vec[_R_G1:_R_G1 + 1, :D]
    be1 = vec[_R_BE1:_R_BE1 + 1, :D]
    bqkv = vec[_R_BQKV:_R_BQKV + 1, :3 * D]
    bp = vec[_R_BP:_R_BP + 1, :D]
    g2 = vec[_R_G2:_R_G2 + 1, :D]
    be2 = vec[_R_BE2:_R_BE2 + 1, :D]
    b1 = vec[_R_B1:_R_B1 + 1, :MLP_H]
    b2 = vec[_R_B2:_R_B2 + 1, :D]

    # padded-token masks (N_PAD > N): kill padded keys, keep padded rows at 0
    key_idx = jax.lax.broadcasted_iota(jnp.int32, (1, 1, N_PAD), 2)
    key_mask = jnp.where(key_idx < N, 0.0, -1e30).astype(jnp.float32)
    row_idx = jax.lax.broadcasted_iota(jnp.int32, (1, N_PAD, 1), 1)
    row_mask = (row_idx < N).astype(jnp.float32)

    x2d = o_ref[...].reshape(BNP, D)                   # (B*N_PAD, D) f32

    # ---- attention branch (1/sqrt(HD) pre-folded into wqkv / q bias) --------
    xn = _layernorm(x2d, g1, be1)
    qkv = _mxu(xn, wqkv_ref[0]) + bqkv                 # (BNP, 3D) f32
    q3 = qkv[:, 0:D].reshape(B, N_PAD, D)
    k3 = qkv[:, D:2 * D].reshape(B, N_PAD, D)
    v3 = qkv[:, 2 * D:3 * D].reshape(B, N_PAD, D)
    wp = wp_ref[0]                                     # (D, D) bf16
    attn_proj = jnp.zeros((BNP, D), jnp.float32)
    # TODO(synk): at real HEADS=16 fuse this loop into one (B*HEADS) batched
    #             contraction instead of per-head lane slices.
    for h in range(HEADS):                             # HEADS=2, static unroll
        sl = slice(h * HD, (h + 1) * HD)
        s = jnp.einsum('bqd,bkd->bqk',
                       q3[:, :, sl].astype(jnp.bfloat16),
                       k3[:, :, sl].astype(jnp.bfloat16),
                       preferred_element_type=jnp.float32)     # (B, N_PAD, N_PAD)
        s = s + key_mask
        s = s - jnp.max(s, axis=-1, keepdims=True)
        p = jnp.exp(s)
        p = p * pl.reciprocal(jnp.sum(p, axis=-1, keepdims=True), approx=True)
        o_h = jnp.einsum('bqk,bkd->bqd',
                         p.astype(jnp.bfloat16),
                         v3[:, :, sl].astype(jnp.bfloat16),
                         preferred_element_type=jnp.float32)   # (B, N_PAD, HD)
        # project this head through its wp row-slice -> lane-dense accumulate,
        # no lane concatenate.
        attn_proj = attn_proj + _mxu(o_h.reshape(BNP, HD), wp[sl, :])
    x2d = x2d + attn_proj + bp

    # ---- MLP branch (exact-erf GELU, matching nn.GELU) ----------------------
    xn2 = _layernorm(x2d, g2, be2)
    h1 = jax.nn.gelu(_mxu(xn2, w1_ref[0]) + b1, approximate=False)
    x2d = x2d + _mxu(h1, w2_ref[0]) + b2

    x = x2d.reshape(B, N_PAD, D) * row_mask            # padded rows stay exactly 0

    @pl.when(l < DEPTH - 1)
    def _store():
        o_ref[...] = x

    # ---- last layer only: F.normalize(dim=-1, eps=1e-12) --------------------
    @pl.when(l == DEPTH - 1)
    def _final():
        n2 = jnp.sum(x * x, axis=-1, keepdims=True)
        o_ref[...] = x * jax.lax.rsqrt(jnp.maximum(n2, 1e-24))


# ----------------------------- pallas_call wrappers ---------------------------
def _build_embed():
    return pl.pallas_call(
        patch_embed_kernel,
        out_shape=jax.ShapeDtypeStruct((B, N_PAD, D), jnp.float32),
        grid=(1,),
        in_specs=[
            pl.BlockSpec((B * NP, PATCH_DIM), lambda i: (0, 0)),   # patches
            pl.BlockSpec((PATCH_DIM, D), lambda i: (0, 0)),        # patch_w (bf16)
            pl.BlockSpec((N + 2, D), lambda i: (0, 0)),            # [patch_b; cls; pos]
        ],
        out_specs=pl.BlockSpec((B, N_PAD, D), lambda i: (0, 0, 0)),
    )


def _build_tower():
    return pl.pallas_call(
        tower_kernel,
        out_shape=jax.ShapeDtypeStruct((B, N_PAD, D), jnp.float32),
        grid_spec=pltpu.PrefetchScalarGridSpec(
            num_scalar_prefetch=0,
            grid=(DEPTH,),
            in_specs=[
                pl.BlockSpec((B, N_PAD, D), lambda l: (0, 0, 0)),      # tokens (resident)
                pl.BlockSpec((1, D, 3 * D), lambda l: (l, 0, 0)),      # wqkv (bf16)
                pl.BlockSpec((1, D, D), lambda l: (l, 0, 0)),          # wp   (bf16)
                pl.BlockSpec((1, D, MLP_H), lambda l: (l, 0, 0)),      # w1   (bf16)
                pl.BlockSpec((1, MLP_H, D), lambda l: (l, 0, 0)),      # w2   (bf16)
                pl.BlockSpec((1, 8, VEC_COLS), lambda l: (l, 0, 0)),   # packed vectors
            ],
            out_specs=pl.BlockSpec((B, N_PAD, D), lambda l: (0, 0, 0)),
        ),
        compiler_params=pltpu.CompilerParams(
            dimension_semantics=("arbitrary",),        # layer axis is sequential
            vmem_limit_bytes=64 * 1024 * 1024,         # headroom for larger configs
        ),
    )


_EMBED = _build_embed()
_TOWER = _build_tower()


# ----------------------------- parameter init --------------------------------
def init_params(key):
    f32, bf16 = jnp.float32, jnp.bfloat16

    def nrm(k, shape, std=0.02):
        return jax.random.normal(k, shape, dtype=f32) * std

    keys = iter(jax.random.split(key, 4 + 9 * DEPTH))

    patch_w = nrm(next(keys), (PATCH_DIM, D)).astype(bf16)   # Conv2d weight, flattened
    patch_b = nrm(next(keys), (D,))
    cls = nrm(next(keys), (D,))
    pos = nrm(next(keys), (N, D))
    embvec = jnp.concatenate([patch_b[None, :], cls[None, :], pos], axis=0)  # (N+2, D)

    wqkv_l, wp_l, w1_l, w2_l, vec_l = [], [], [], [], []
    for _ in range(DEPTH):
        wqkv = nrm(next(keys), (D, 3 * D))
        wqkv = wqkv.at[:, 0:D].multiply(ATT_SCALE)           # fold attn scale into q cols
        q_bias = nrm(next(keys), (D,)) * ATT_SCALE           # ... and into the q bias
        v_bias = nrm(next(keys), (D,))
        # EVA attention: qkv bias = cat(q_bias, zeros_like(k_bias), v_bias)
        bqkv = jnp.concatenate([q_bias, jnp.zeros((D,), f32), v_bias])
        wp = nrm(next(keys), (D, D))
        bp = nrm(next(keys), (D,))
        w1 = nrm(next(keys), (D, MLP_H))
        b1 = nrm(next(keys), (MLP_H,))
        w2 = nrm(next(keys), (MLP_H, D))
        b2 = nrm(next(keys), (D,))

        rows = [jnp.ones((D,), f32), jnp.zeros((D,), f32),   # g1, be1
                bqkv, bp,
                jnp.ones((D,), f32), jnp.zeros((D,), f32),   # g2, be2
                b1, b2]
        vec = jnp.zeros((8, VEC_COLS), f32)
        for r_i, r in enumerate(rows):
            vec = vec.at[r_i, :r.shape[0]].set(r)

        wqkv_l.append(wqkv.astype(bf16))
        wp_l.append(wp.astype(bf16))
        w1_l.append(w1.astype(bf16))
        w2_l.append(w2.astype(bf16))
        vec_l.append(vec)

    return {
        "patch_w": patch_w,
        "embvec": embvec,
        "wqkv": jnp.stack(wqkv_l),
        "wp": jnp.stack(wp_l),
        "w1": jnp.stack(w1_l),
        "w2": jnp.stack(w2_l),
        "vecs": jnp.stack(vec_l),
    }


# ----------------------------- full forward -----------------------------------
def eva_clip_vision_tower_forward(images, params):
    """images: NCHW (B, C, IMG, IMG) f32 -> (B, N, D) L2-normalized tokens."""
    # glue: non-overlapping patch extraction flattened in (C, ph, pw) order
    # (matches Conv2d(stride=patch)); done as plain XLA layout prep.
    x = images.reshape(B, C, GH, P, GW, P)
    x = x.transpose(0, 2, 4, 1, 3, 5).reshape(B * NP, PATCH_DIM)
    tokens = _EMBED(x, params["patch_w"], params["embvec"])          # (B, N_PAD, D)
    out = _TOWER(tokens, params["wqkv"], params["wp"], params["w1"],
                 params["w2"], params["vecs"])                       # (B, N_PAD, D)
    return out[:, :N, :]                                             # drop pad rows


if __name__ == "__main__":
    root = jax.random.PRNGKey(0)
    k_img, k_par = jax.random.split(root)
    images = jax.random.normal(k_img, (B, C, IMG, IMG), dtype=jnp.float32)
    params = init_params(k_par)

    out = eva_clip_vision_tower_forward(images, params)
    out = jax.block_until_ready(out)

    assert out.shape == (B, N, D), out.shape
    assert out.dtype == jnp.float32
    # every real token should be unit-norm after F.normalize
    norms = jnp.linalg.norm(out, axis=-1)
    assert bool(jnp.all(jnp.abs(norms - 1.0) < 1e-3)), norms
    print("KERNEL_OK")
</pallas_src>

<mosaic_0001>
module attributes {stable_mosaic.version = 11 : i64} {
  func.func @patch_embed_kernel(%arg0: i32, %arg1: memref<8x192xf32, #tpu.memory_space<vmem>>, %arg2: memref<192x32xbf16, #tpu.memory_space<vmem>>, %arg3: memref<7x32xf32, #tpu.memory_space<vmem>>, %arg4: memref<2x8x32xf32, #tpu.memory_space<vmem>>) attributes {dimension_semantics = [#tpu.dimension_semantics<arbitrary>], iteration_bounds = array<i64: 1>, scalar_prefetch = 0 : i64, scratch_operands = 0 : i64, tpu.core_type = #tpu.core_type<tc>, window_params = [{pipeline_mode = #tpu.pipeline_mode<synchronous>, transform_indices = @transform_0, window_bounds = array<i64: 8, 192>}, {pipeline_mode = #tpu.pipeline_mode<synchronous>, transform_indices = @transform_1, window_bounds = array<i64: 192, 32>}, {pipeline_mode = #tpu.pipeline_mode<synchronous>, transform_indices = @transform_2, window_bounds = array<i64: 7, 32>}, {pipeline_mode = #tpu.pipeline_mode<synchronous>, transform_indices = @transform_3, window_bounds = array<i64: 2, 8, 32>}]} {
    %c0 = arith.constant 0 : index
    %c0_0 = arith.constant 0 : index
    %0 = vector.load %arg3[%c0, %c0_0] : memref<7x32xf32, #tpu.memory_space<vmem>>, vector<7x32xf32>
    %1 = vector.extract_strided_slice %0 {offsets = [0, 0], sizes = [1, 32], strides = [1, 1]} : vector<7x32xf32> to vector<1x32xf32>
    %2 = vector.extract_strided_slice %0 {offsets = [1, 0], sizes = [1, 32], strides = [1, 1]} : vector<7x32xf32> to vector<1x32xf32>
    %3 = vector.extract_strided_slice %0 {offsets = [2, 0], sizes = [5, 32], strides = [1, 1]} : vector<7x32xf32> to vector<5x32xf32>
    %c0_1 = arith.constant 0 : index
    %c0_2 = arith.constant 0 : index
    %4 = vector.load %arg1[%c0_1, %c0_2] : memref<8x192xf32, #tpu.memory_space<vmem>>, vector<8x192xf32>
    %c0_3 = arith.constant 0 : index
    %c0_4 = arith.constant 0 : index
    %5 = vector.load %arg2[%c0_3, %c0_4] : memref<192x32xbf16, #tpu.memory_space<vmem>>, vector<192x32xbf16>
    %6 = arith.truncf %4 : vector<8x192xf32> to vector<8x192xbf16>
    %cst = arith.constant dense<0.000000e+00> : vector<8x32xf32>
    %7 = tpu.matmul %6, %5, %cst {dimension_numbers = #tpu.dot_dimension_numbers<[1], [0], [0], [1], [0, 0, 1, 1], [], []>} : vector<8x192xbf16>, vector<192x32xbf16>, vector<8x32xf32> -> vector<8x32xf32>
    %8 = vector.broadcast %1 : vector<1x32xf32> to vector<8x32xf32>
    %9 = arith.addf %7, %8 : vector<8x32xf32>
    %10 = vector.shape_cast %9 : vector<8x32xf32> to vector<2x4x32xf32>
    %11 = vector.extract_strided_slice %3 {offsets = [1, 0], sizes = [4, 32], strides = [1, 1]} : vector<5x32xf32> to vector<4x32xf32>
    %12 = vector.shape_cast %11 : vector<4x32xf32> to vector<1x4x32xf32>
    %13 = vector.broadcast %12 : vector<1x4x32xf32> to vector<2x4x32xf32>
    %14 = arith.addf %10, %13 : vector<2x4x32xf32>
    %15 = vector.extract_strided_slice %3 {offsets = [0, 0], sizes = [1, 32], strides = [1, 1]} : vector<5x32xf32> to vector<1x32xf32>
    %16 = arith.addf %2, %15 : vector<1x32xf32>
    %17 = vector.shape_cast %16 : vector<1x32xf32> to vector<1x1x32xf32>
    %18 = vector.shape_cast %17 : vector<1x1x32xf32> to vector<1x1x32xf32>
    %19 = vector.broadcast %18 : vector<1x1x32xf32> to vector<2x1x32xf32>
    %c0_5 = arith.constant 0 : index
    %c0_6 = arith.constant 0 : index
    %c0_7 = arith.constant 0 : index
    %20 = vector.load %arg4[%c0_5, %c0_6, %c0_7] : memref<2x8x32xf32, #tpu.memory_space<vmem>>, vector<2x1x32xf32>
    tpu.vector_store %arg4[%c0_5, %c0_6, %c0_7], %19 {strides = array<i32>} : memref<2x8x32xf32, #tpu.memory_space<vmem>>, vector<2x1x32xf32>,
    %c0_8 = arith.constant 0 : index
    %c1 = arith.constant 1 : index
    %c0_9 = arith.constant 0 : index
    %21 = vector.load %arg4[%c0_8, %c1, %c0_9] : memref<2x8x32xf32, #tpu.memory_space<vmem>>, vector<2x4x32xf32>
    tpu.vector_store %arg4[%c0_8, %c1, %c0_9], %14 {strides = array<i32>} : memref<2x8x32xf32, #tpu.memory_space<vmem>>, vector<2x4x32xf32>,
    %cst_10 = arith.constant 0.000000e+00 : f32
    %22 = vector.broadcast %cst_10 : f32 to vector<2x3x32xf32>
    %c0_11 = arith.constant 0 : index
    %c5 = arith.constant 5 : index
    %c0_12 = arith.constant 0 : index
    %23 = vector.load %arg4[%c0_11, %c5, %c0_12] : memref<2x8x32xf32, #tpu.memory_space<vmem>>, vector<2x3x32xf32>
    tpu.vector_store %arg4[%c0_11, %c5, %c0_12], %22 {strides = array<i32>} : memref<2x8x32xf32, #tpu.memory_space<vmem>>, vector<2x3x32xf32>,
    return
  }
  func.func @transform_0(%arg0: i32) -> (i32, i32) {
    %c0_i32 = arith.constant 0 : i32
    %c0_i32_0 = arith.constant 0 : i32
    %c0_i32_1 = arith.constant 0 : i32
    return %c0_i32, %c0_i32_0 : i32, i32
  }
  func.func @transform_1(%arg0: i32) -> (i32, i32) {
    %c0_i32 = arith.constant 0 : i32
    %c0_i32_0 = arith.constant 0 : i32
    %c0_i32_1 = arith.constant 0 : i32
    return %c0_i32, %c0_i32_0 : i32, i32
  }
  func.func @transform_2(%arg0: i32) -> (i32, i32) {
    %c0_i32 = arith.constant 0 : i32
    %c0_i32_0 = arith.constant 0 : i32
    %c0_i32_1 = arith.constant 0 : i32
    return %c0_i32, %c0_i32_0 : i32, i32
  }
  func.func @transform_3(%arg0: i32) -> (i32, i32, i32) {
    %c0_i32 = arith.constant 0 : i32
    %c0_i32_0 = arith.constant 0 : i32
    %c0_i32_1 = arith.constant 0 : i32
    %c0_i32_2 = arith.constant 0 : i32
    return %c0_i32, %c0_i32_0, %c0_i32_1 : i32, i32, i32
  }
}

</mosaic_0001>

<llo_original>
// kernel: tpu_custom_call.1
$region0: #{tpu_custom_call.1}
  #allocation0 [shape = 'u32[]', space=smem, size = 0x4, offset = 0x4, fixed_abs, tag = 'smem constant byte address 0x4 - core index']
  #allocation1 [shape = 'u32[144,128]{1,0:T(1,128)}', space=vmem, size = 0x12000, scoped, tag = 'internal scratch']
  %s0 = inlined_call_operand.vmem [shape: f32[8,192], index: 0, kind: input, shape index: {}]
  %s1 = inlined_call_operand.vmem [shape: bf16[192,32], index: 1, kind: input, shape index: {}]
  %s2 = inlined_call_operand.vmem [shape: f32[7,32], index: 2, kind: input, shape index: {}]
  %s3 = inlined_call_operand.hbm [shape: f32[2,8,32], index: 3, kind: output, shape index: {}]
  %s4 = sld [smem:[#allocation0]]
  $region22: #{tpu_custom_call.1} parent=0
    _
  %s6 = ssub.s32 1, %s4
  %s7 = scalar_select 0, %s6, %s4
  $region1: #{tpu_custom_call.1} parent=0
    #allocation2 [shape = 'u8[8192]{0}', space=vmem, size = 0x2000, scoped, tag = 'output window, operand 0, single buffered']
    #allocation3 [shape = 's32[1]{0}', space=sflag, size = 0x4, scoped, tag = 'scoped memory for tpu_custom_call.1']
    %8 = vsyncpa [#allocation3], 0
    // Predicated region
    $region2: #{tpu_custom_call.1} parent=1 // pred_check
      _
    $region3: #{tpu_custom_call.1} parent=1 // pred_check_branch
      %10 = sbr.rel (0) target = $region5
    $region4: #{tpu_custom_call.1} parent=1 // pred_region
      _
    $region5: #{tpu_custom_call.1} parent=1 // pred_fallthru
      _
    // Predicated region
    $region6: #{tpu_custom_call.1} parent=1 // pred_check
      _
    $region7: #{tpu_custom_call.1} parent=1 // pred_check_branch
      %12 = sbr.rel (0) target = $region9
    $region8: #{tpu_custom_call.1} parent=1 // pred_region
      _
    $region9: #{tpu_custom_call.1} parent=1 // pred_fallthru
      _
    // Predicated region
    $region10: #{tpu_custom_call.1} parent=1 // pred_check
      _
    $region11: #{tpu_custom_call.1} parent=1 // pred_check_branch
      %14 = sbr.rel (0) target = $region13
    $region12: #{tpu_custom_call.1} parent=1 // pred_region
      _
    $region13: #{tpu_custom_call.1} parent=1 // pred_fallthru
      _
    %v16 = vld [vmem:[%s2] sm:$0x7f]
    %v17 = vld [vmem:[%s0] sm:$0xff]
    %v18 = vld [vmem:[%s0 + $0x8] sm:$0xff]
    %v19 = vld [vmem:[%s1] sm:$0xf]
    %v20 = vld [vmem:[%s1 + $0x4] sm:$0xf]
    %v21 = vld [vmem:[%s1 + $0x8] sm:$0xf]
    %v22 = vld [vmem:[%s1 + $0xc] sm:$0xf]
    %v23 = vld [vmem:[%s1 + $0x10] sm:$0xf]
    %v24 = vld [vmem:[%s1 + $0x14] sm:$0xf]
    %v25 = vld [vmem:[%s1 + $0x18] sm:$0xf]
    %v26 = vld [vmem:[%s1 + $0x1c] sm:$0xf]
    %v27 = vld [vmem:[%s1 + $0x20] sm:$0xf]
    %v28 = vld [vmem:[%s1 + $0x24] sm:$0xf]
    %v29 = vld [vmem:[%s1 + $0x28] sm:$0xf]
    %v30 = vld [vmem:[%s1 + $0x2c] sm:$0xf]
    %v31 = vld [vmem:[%s1 + $0x30] sm:$0xf]
    %v32 = vld [vmem:[%s1 + $0x34] sm:$0xf]
    %v33 = vld [vmem:[%s1 + $0x38] sm:$0xf]
    %v34 = vld [vmem:[%s1 + $0x3c] sm:$0xf]
    %v35 = vld [vmem:[%s1 + $0x40] sm:$0xf]
    %v36 = vld [vmem:[%s1 + $0x44] sm:$0xf]
    %v37 = vld [vmem:[%s1 + $0x48] sm:$0xf]
    %v38 = vld [vmem:[%s1 + $0x4c] sm:$0xf]
    %v39 = vld [vmem:[%s1 + $0x50] sm:$0xf]
    %v40 = vld [vmem:[%s1 + $0x54] sm:$0xf]
    %v41 = vld [vmem:[%s1 + $0x58] sm:$0xf]
    %v42 = vld [vmem:[%s1 + $0x5c] sm:$0xf]
    %v43 = vpack.c.bf16 %v17, %v17
    %v44 = vpack.c.bf16 %v18, %v18
    %v45 = vlaneseq
    %v46 = vshrl.u32 %v45, 7
    %v47 = vsub.s32 0, %v46
    %v48 = vrot.slane %v16, %v47
    %v73 = vunpack.c.l.b16 %v19
    %v74 = vunpack.c.l.b16 %v20
    %v75 = vunpack.c.l.b16 %v21
    %v76 = vunpack.c.l.b16 %v22
    %v77 = vunpack.c.l.b16 %v23
    %v78 = vunpack.c.l.b16 %v24
    %v79 = vunpack.c.l.b16 %v25
    %v80 = vunpack.c.l.b16 %v26
    %v81 = vunpack.c.l.b16 %v27
    %v82 = vunpack.c.l.b16 %v28
    %v83 = vunpack.c.l.b16 %v29
    %v84 = vunpack.c.l.b16 %v30
    %v85 = vunpack.c.l.b16 %v31
    %v86 = vunpack.c.l.b16 %v32
    %v87 = vunpack.c.l.b16 %v33
    %v88 = vunpack.c.l.b16 %v34
    %v89 = vunpack.c.l.b16 %v35
    %v90 = vunpack.c.l.b16 %v36
    %v91 = vunpack.c.l.b16 %v37
    %v92 = vunpack.c.l.b16 %v38
    %v93 = vunpack.c.l.b16 %v39
    %v94 = vunpack.c.l.b16 %v40
    %v95 = vunpack.c.l.b16 %v41
    %v96 = vunpack.c.l.b16 %v42
    %v97 = vpack.c.b16 %v74, %v73
    %v98 = vpack.c.b16 %v76, %v75
    %v99 = vpack.c.b16 %v78, %v77
    %v100 = vpack.c.b16 %v80, %v79
    %v101 = vpack.c.b16 %v82, %v81
    %v102 = vpack.c.b16 %v84, %v83
    %v103 = vpack.c.b16 %v86, %v85
    %v104 = vpack.c.b16 %v88, %v87
    %v105 = vpack.c.b16 %v90, %v89
    %v106 = vpack.c.b16 %v92, %v91
    %v107 = vpack.c.b16 %v94, %v93
    %v108 = vpack.c.b16 %v96, %v95
    %vm121 = vcmask 523264
    %v123 = vsel %vm121, %v44, 0
    %125 = vmatprep.subr.bf16.mxu0 0
    %126 = vmatpush1.bf16.msra.mxu0 %v104
    %127 = vmatprep.subr.bf16.mxu0 0
    %128 = vmatpush1.bf16.msra.mxu0 %v103
    %129 = vmatprep.subr.bf16.mxu0 0
    %130 = vmatpush1.bf16.msra.mxu0 %v102
    %131 = vmatprep.subr.bf16.mxu0 0
    %132 = vmatpush1.bf16.msra.mxu0 %v101
    %133 = vmatprep.subr.bf16.mxu0 0
    %134 = vmatpush1.bf16.msra.mxu0 %v100
    %135 = vmatprep.subr.bf16.mxu0 0
    %136 = vmatpush1.bf16.msra.mxu0 %v99
    %137 = vmatprep.subr.bf16.mxu0 0
    %138 = vmatpush1.bf16.msra.mxu0 %v98
    %139 = vmatprep.subr.bf16.mxu0 0
    %140 = vmatpush1.bf16.msra.mxu0 %v97
    %141 = vmatprep.subr.bf16.mxu0 0
    %142 = vmatpush2.bf16.msra.mxu0 0
    %143 = vmatprep.subr.bf16.mxu0 0
    %144 = vmatpush2.bf16.msra.mxu0 0
    %145 = vmatprep.subr.bf16.mxu0 0
    %146 = vmatpush2.bf16.msra.mxu0 0
    %147 = vmatprep.subr.bf16.mxu0 0
    %148 = vmatpush2.bf16.msra.mxu0 0
    %149 = vmatprep.subr.bf16.mxu0 0
    %150 = vmatpush2.bf16.msra.mxu0 %v108
    %151 = vmatprep.subr.bf16.mxu0 0
    %152 = vmatpush2.bf16.msra.mxu0 %v107
    %153 = vmatprep.subr.bf16.mxu0 0
    %154 = vmatpush2.bf16.msra.mxu0 %v106
    %155 = vmatprep.subr.bf16.mxu0 0
    %156 = vmatpush2.bf16.msra.mxu0 %v105
    %157 = vmatprep.mubr.bf16.mxu0 %v123
    %158 = vmatmul.mubr.bf16.gmra.mxu0 %v43
    %v159 = vpop.f32.mrf.mxu0
    %v160 = vadd.f32 %v48, %v159
    %v161 = vpop.f32.mrf.mxu0
    %v162 = vpop.f32.mrf.mxu0
    %v163 = vpop.f32.mrf.mxu0
    %164 = vdwg.mxu0
    %v166 = vcombine.high %v160, %v160
    %v169 = vcombine.high %v16, %v16
    %vm170 = vcmask 1040384
    %vm171 = vcmask 1044484
    %vm172 = vmor %vm170, %vm171
    %v173 = vrot.slane %v16, 7
    %v174 = vrot.slane %v173, 4
    %v175 = vrot.slane %v169, 7
    %v176 = vsel %vm172, %v174, %v175
    %v178 = vadd.f32 %v160, %v176
    %v179 = vadd.f32 %v166, %v176
    %v180 = vrot.slane %v16, 1
    %v182 = vadd.f32 %v16, %v180
    %vm183 = vcmask 254977
    %184 = vst.msk [vmem:[#allocation2 - $0x1] sm:$0x2] %vm183, %v182
    %185 = vst.msk [vmem:[#allocation2 + $0x7] sm:$0x2] %vm183, %v182
    %vm186 = vcmask 257024
    %187 = vst.msk [vmem:[#allocation2 + $0x1] sm:$0xf] %vm186, %v178
    %188 = vst.msk [vmem:[#allocation2 + $0x9] sm:$0xf] %vm186, %v179
    %vm189 = vcmask 256000
    %190 = vst.msk [vmem:[#allocation2 + $0x5] sm:$0x7] %vm189, 0.0
    %191 = vst.msk [vmem:[#allocation2 + $0xd] sm:$0x7] %vm189, 0.0
    // Predicated region
    $region14: #{tpu_custom_call.1} parent=1 // pred_check
      _
    $region15: #{tpu_custom_call.1} parent=1 // pred_check_branch
      %193 = sbr.rel (0) target = $region17
    $region16: #{tpu_custom_call.1} parent=1 // pred_region
      %s195 = ssub.s32 256, 256
      %196 = vsyncadd [#allocation3], %s195
      %s197 = sshll.u32 [#allocation2], 4
      %s198 = int_to_ptr.vmem [resolvable:$true] %s197
      %203 = dma.vmem_to_hbm [thread:$0]  %s198, 256, %s3, [#allocation3], 128, 128, 8
    $region17: #{tpu_custom_call.1} parent=1 // pred_fallthru
      _
    // Predicated region
    $region18: #{tpu_custom_call.1} parent=1 // pred_check
      _
    $region19: #{tpu_custom_call.1} parent=1 // pred_check_branch
      %205 = sbr.rel (0) target = $region21
    $region20: #{tpu_custom_call.1} parent=1 // pred_region
      %206 = dma.done [#allocation3], 256
    $region21: #{tpu_custom_call.1} parent=1 // pred_fallthru
      _
    %207 = vsyncpa [#allocation3], 1

</llo_original>
